<compile_context>
chip_gen: v7x
topology: tpu7x:2x2x1
jax: 0.10.0
libtpu: 0.0.40
codegen_flags: <defaults>
</compile_context>

<pallas_src>
import functools

import jax
import jax.numpy as jnp
from jax.experimental import pallas as pl
from jax.experimental.pallas import tpu as pltpu


def _round_up(x, m):
    return (x + m - 1) // m * m


_VMEM_LIMIT = 32 * 1024 * 1024      # <= physical scoped VMEM on v5e/v6e/v7x
_VMEM_BUDGET = 20 * 1024 * 1024     # working-set budget incl. double buffering


def _pick_block_m(m_rows, k, n, itemsize):
    """Largest power-of-two row tile whose double-buffered working set fits."""
    tm = 1024
    while tm > 8:
        live = 2 * (tm * k + k * n + tm * n + n + 2 * k) * itemsize
        if live <= _VMEM_BUDGET:
            break
        tm //= 2
    return min(tm, _round_up(m_rows, 8))


# ----------------------------- Pallas kernels -----------------------------

def _ln_matmul_kernel(*refs, eps, do_norm, activation):
    """(optional LayerNorm over lanes, f32 stats) -> matmul -> bias -> act."""
    if do_norm:
        x_ref, g_ref, b_ref, w_ref, bias_ref, o_ref = refs
    else:
        x_ref, w_ref, bias_ref, o_ref = refs

    if do_norm:
        x = x_ref[...].astype(jnp.float32)                       # (tm, K)
        mean = jnp.mean(x, axis=-1, keepdims=True)
        xc = x - mean
        var = jnp.mean(xc * xc, axis=-1, keepdims=True)          # E[(x-mean)^2]
        y = xc * jax.lax.rsqrt(var + eps)
        y = y * g_ref[...].astype(jnp.float32) + b_ref[...].astype(jnp.float32)
        xk = y.astype(w_ref.dtype)
    else:
        xk = x_ref[...]

    acc = jnp.dot(xk, w_ref[...], preferred_element_type=jnp.float32)
    acc = acc + bias_ref[...].astype(jnp.float32)
    if activation == "gelu":
        acc = jax.nn.gelu(acc, approximate=True)
    o_ref[...] = acc.astype(o_ref.dtype)


def _ln_kernel(x_ref, g_ref, b_ref, o_ref, *, eps):
    x = x_ref[...].astype(jnp.float32)
    mean = jnp.mean(x, axis=-1, keepdims=True)
    xc = x - mean
    var = jnp.mean(xc * xc, axis=-1, keepdims=True)
    y = xc * jax.lax.rsqrt(var + eps)
    y = y * g_ref[...].astype(jnp.float32) + b_ref[...].astype(jnp.float32)
    o_ref[...] = y.astype(o_ref.dtype)


# ----------------------------- wrappers -----------------------------

def _fused_linear(x2d, w, bias, gamma=None, beta=None, activation=None,
                  eps=1e-5, out_dtype=None):
    """out = act( LayerNorm?(x2d) @ w + bias ).  x2d:(M,K) w:(K,N) bias:(N,)."""
    M, K = x2d.shape
    Kw, N = w.shape
    assert K == Kw, (K, Kw)
    out_dtype = out_dtype or x2d.dtype
    do_norm = gamma is not None

    Mp = _round_up(M, 8)                     # at most 7 padded rows
    if Mp != M:
        x2d = jnp.pad(x2d, ((0, Mp - M), (0, 0)))
    itemsize = jnp.dtype(x2d.dtype).itemsize
    tm = _pick_block_m(Mp, K, N, max(itemsize, 2))
    grid_m = pl.cdiv(Mp, tm)

    operands = [x2d]
    in_specs = [pl.BlockSpec((tm, K), lambda i: (i, 0))]
    if do_norm:
        operands += [gamma.reshape(1, K).astype(jnp.float32),
                     beta.reshape(1, K).astype(jnp.float32)]
        in_specs += [pl.BlockSpec((1, K), lambda i: (0, 0)),
                     pl.BlockSpec((1, K), lambda i: (0, 0))]
    operands += [w, bias.reshape(1, N).astype(jnp.float32)]
    in_specs += [pl.BlockSpec((K, N), lambda i: (0, 0)),
                 pl.BlockSpec((1, N), lambda i: (0, 0))]

    cost = pl.CostEstimate(
        flops=2 * Mp * K * N + (8 * Mp * K if do_norm else 0),
        transcendentals=(Mp * N if activation == "gelu" else 0)
                        + (Mp if do_norm else 0),
        bytes_accessed=(Mp * K + K * N) * itemsize
                       + Mp * N * jnp.dtype(out_dtype).itemsize)

    out = pl.pallas_call(
        functools.partial(_ln_matmul_kernel, eps=eps, do_norm=do_norm,
                          activation=activation),
        out_shape=jax.ShapeDtypeStruct((Mp, N), out_dtype),
        grid_spec=pltpu.PrefetchScalarGridSpec(
            num_scalar_prefetch=0,
            grid=(grid_m,),
            in_specs=in_specs,
            out_specs=pl.BlockSpec((tm, N), lambda i: (i, 0)),
        ),
        compiler_params=pltpu.CompilerParams(
            dimension_semantics=("parallel",),
            vmem_limit_bytes=_VMEM_LIMIT),
        cost_estimate=cost,
    )(*operands)
    return out[:M] if Mp != M else out


def layernorm_linear(x2d, gamma, beta, w, b, activation=None, eps=1e-5):
    """Fused LayerNorm + Linear (+ activation): the PreNorm fast path."""
    return _fused_linear(x2d, w, b, gamma=gamma, beta=beta,
                         activation=activation, eps=eps)


def linear(x2d, w, b, activation=None):
    return _fused_linear(x2d, w, b, activation=activation)


def layer_norm(x, gamma, beta, eps=1e-5):
    """nn.LayerNorm(dim) over the last axis (for arbitrary PreNorm `fn`)."""
    orig_shape = x.shape
    D = orig_shape[-1]
    x2d = x.reshape(-1, D)
    M = x2d.shape[0]
    Mp = _round_up(M, 8)
    if Mp != M:
        x2d = jnp.pad(x2d, ((0, Mp - M), (0, 0)))
    tm = _pick_block_m(Mp, D, 0, max(jnp.dtype(x2d.dtype).itemsize, 2))
    out = pl.pallas_call(
        functools.partial(_ln_kernel, eps=eps),
        out_shape=jax.ShapeDtypeStruct((Mp, D), x.dtype),
        grid_spec=pltpu.PrefetchScalarGridSpec(
            num_scalar_prefetch=0,
            grid=(pl.cdiv(Mp, tm),),
            in_specs=[pl.BlockSpec((tm, D), lambda i: (i, 0)),
                      pl.BlockSpec((1, D), lambda i: (0, 0)),
                      pl.BlockSpec((1, D), lambda i: (0, 0))],
            out_specs=pl.BlockSpec((tm, D), lambda i: (i, 0)),
        ),
        compiler_params=pltpu.CompilerParams(
            dimension_semantics=("parallel",),
            vmem_limit_bytes=_VMEM_LIMIT),
    )(x2d, gamma.reshape(1, D).astype(jnp.float32),
      beta.reshape(1, D).astype(jnp.float32))
    out = out[:M] if Mp != M else out
    return out.reshape(orig_shape)


# ----------------------------- PreNorm module -----------------------------

def prenorm_apply(ln_params, x, fn, **kwargs):
    """Literal PreNorm.forward: fn(LayerNorm(x), **kwargs) for arbitrary fn."""
    return fn(layer_norm(x, ln_params["g"], ln_params["b"]), **kwargs)


def init_prenorm_feedforward(key, dim, hidden, dtype=jnp.bfloat16):
    k1, k2 = jax.random.split(key)
    return {
        "ln": {"g": jnp.ones((dim,), jnp.float32),
               "b": jnp.zeros((dim,), jnp.float32)},
        "w1": (jax.random.normal(k1, (dim, hidden), jnp.float32)
               / jnp.sqrt(jnp.float32(dim))).astype(dtype),
        "b1": jnp.zeros((hidden,), jnp.float32),
        "w2": (jax.random.normal(k2, (hidden, dim), jnp.float32)
               / jnp.sqrt(jnp.float32(hidden))).astype(dtype),
        "b2": jnp.zeros((dim,), jnp.float32),
    }


def prenorm_feedforward(params, x):
    """PreNorm(dim, FeedForward(dim, hidden)): LayerNorm fused into the first
    linear's Pallas kernel (no HBM round-trip of the normalized activation)."""
    B, S, D = x.shape
    x2d = x.reshape(B * S, D)
    h = layernorm_linear(x2d, params["ln"]["g"], params["ln"]["b"],
                         params["w1"], params["b1"], activation="gelu")
    y = linear(h, params["w2"], params["b2"])
    return y.reshape(B, S, -1)


# ----------------------------- reference (pure JAX) -----------------------------

def _ref_layer_norm(x, g, b, eps=1e-5):
    xf = x.astype(jnp.float32)
    mean = xf.mean(-1, keepdims=True)
    var = ((xf - mean) ** 2).mean(-1, keepdims=True)
    return (xf - mean) * jax.lax.rsqrt(var + eps) * g + b


def _ref_prenorm_feedforward(params, x):
    y = _ref_layer_norm(x, params["ln"]["g"], params["ln"]["b"])
    h = jax.nn.gelu(y @ params["w1"].astype(jnp.float32) + params["b1"],
                    approximate=True)
    return h @ params["w2"].astype(jnp.float32) + params["b2"]


if __name__ == "__main__":
    key = jax.random.PRNGKey(0)
    pkey, xkey = jax.random.split(key)
    B, S, D, H = 2, 16, 128, 256                       # lane-dense dim / hidden
    params = init_prenorm_feedforward(pkey, D, H, dtype=jnp.bfloat16)
    x = jax.random.normal(xkey, (B, S, D), jnp.float32).astype(jnp.bfloat16)

    fwd = jax.jit(prenorm_feedforward)
    out = fwd(params, x)
    jax.block_until_ready(out)
    assert out.shape == (B, S, D), out.shape
    assert bool(jnp.all(jnp.isfinite(out.astype(jnp.float32))))

    ref = _ref_prenorm_feedforward(params, x)
    err = float(jnp.max(jnp.abs(out.astype(jnp.float32) - ref)))
    assert err < 1e-1, err

    # Standalone LayerNorm kernel: the generic PreNorm path for arbitrary fn.
    ln_out = jax.jit(layer_norm)(x, params["ln"]["g"], params["ln"]["b"])
    jax.block_until_ready(ln_out)
    ln_ref = _ref_layer_norm(x, params["ln"]["g"], params["ln"]["b"])
    ln_err = float(jnp.max(jnp.abs(ln_out.astype(jnp.float32) - ln_ref)))
    assert ln_err < 5e-2, ln_err

    print("KERNEL_OK")
</pallas_src>

<mosaic_0001>
module attributes {stable_mosaic.version = 11 : i64} {
  func.func @_ln_matmul_kernel(%arg0: i32, %arg1: memref<32x256xbf16, #tpu.memory_space<vmem>>, %arg2: memref<256x128xbf16, #tpu.memory_space<vmem>>, %arg3: memref<1x128xf32, #tpu.memory_space<vmem>>, %arg4: memref<32x128xbf16, #tpu.memory_space<vmem>>) attributes {dimension_semantics = [#tpu.dimension_semantics<parallel>], iteration_bounds = array<i64: 1>, scalar_prefetch = 0 : i64, scratch_operands = 0 : i64, tpu.core_type = #tpu.core_type<tc>, window_params = [{transform_indices = @transform_0, window_bounds = array<i64: 32, 256>}, {pipeline_mode = #tpu.pipeline_mode<synchronous>, transform_indices = @transform_1, window_bounds = array<i64: 256, 128>}, {pipeline_mode = #tpu.pipeline_mode<synchronous>, transform_indices = @transform_2, window_bounds = array<i64: 1, 128>}, {transform_indices = @transform_3, window_bounds = array<i64: 32, 128>}]} {
    %c0 = arith.constant 0 : index
    %c0_0 = arith.constant 0 : index
    %0 = vector.load %arg1[%c0, %c0_0] : memref<32x256xbf16, #tpu.memory_space<vmem>>, vector<32x256xbf16>
    %c0_1 = arith.constant 0 : index
    %c0_2 = arith.constant 0 : index
    %1 = vector.load %arg2[%c0_1, %c0_2] : memref<256x128xbf16, #tpu.memory_space<vmem>>, vector<256x128xbf16>
    %cst = arith.constant dense<0.000000e+00> : vector<32x128xf32>
    %2 = tpu.matmul %0, %1, %cst {dimension_numbers = #tpu.dot_dimension_numbers<[1], [0], [0], [1], [0, 0, 1, 1], [], []>} : vector<32x256xbf16>, vector<256x128xbf16>, vector<32x128xf32> -> vector<32x128xf32>
    %c0_3 = arith.constant 0 : index
    %c0_4 = arith.constant 0 : index
    %3 = vector.load %arg3[%c0_3, %c0_4] : memref<1x128xf32, #tpu.memory_space<vmem>>, vector<1x128xf32>
    %4 = vector.broadcast %3 : vector<1x128xf32> to vector<32x128xf32>
    %5 = arith.addf %2, %4 : vector<32x128xf32>
    %6 = arith.truncf %5 : vector<32x128xf32> to vector<32x128xbf16>
    %c0_5 = arith.constant 0 : index
    %c0_6 = arith.constant 0 : index
    %7 = vector.load %arg4[%c0_5, %c0_6] : memref<32x128xbf16, #tpu.memory_space<vmem>>, vector<32x128xbf16>
    tpu.vector_store %arg4[%c0_5, %c0_6], %6 {strides = array<i32>} : memref<32x128xbf16, #tpu.memory_space<vmem>>, vector<32x128xbf16>,
    return
  }
  func.func @transform_0(%arg0: i32) -> (i32, i32) {
    %c0_i32 = arith.constant 0 : i32
    %c0_i32_0 = arith.constant 0 : i32
    return %arg0, %c0_i32 : i32, i32
  }
  func.func @transform_1(%arg0: i32) -> (i32, i32) {
    %c0_i32 = arith.constant 0 : i32
    %c0_i32_0 = arith.constant 0 : i32
    %c0_i32_1 = arith.constant 0 : i32
    return %c0_i32, %c0_i32_0 : i32, i32
  }
  func.func @transform_2(%arg0: i32) -> (i32, i32) {
    %c0_i32 = arith.constant 0 : i32
    %c0_i32_0 = arith.constant 0 : i32
    %c0_i32_1 = arith.constant 0 : i32
    return %c0_i32, %c0_i32_0 : i32, i32
  }
  func.func @transform_3(%arg0: i32) -> (i32, i32) {
    %c0_i32 = arith.constant 0 : i32
    %c0_i32_0 = arith.constant 0 : i32
    return %arg0, %c0_i32 : i32, i32
  }
}

module attributes {stable_mosaic.version = 11 : i64} {
  func.func @_ln_matmul_kernel(%arg0: i32, %arg1: memref<32x128xbf16, #tpu.memory_space<vmem>>, %arg2: memref<1x128xf32, #tpu.memory_space<vmem>>, %arg3: memref<1x128xf32, #tpu.memory_space<vmem>>, %arg4: memref<128x256xbf16, #tpu.memory_space<vmem>>, %arg5: memref<1x256xf32, #tpu.memory_space<vmem>>, %arg6: memref<32x256xbf16, #tpu.memory_space<vmem>>) attributes {dimension_semantics = [#tpu.dimension_semantics<parallel>], iteration_bounds = array<i64: 1>, scalar_prefetch = 0 : i64, scratch_operands = 0 : i64, tpu.core_type = #tpu.core_type<tc>, window_params = [{transform_indices = @transform_0, window_bounds = array<i64: 32, 128>}, {pipeline_mode = #tpu.pipeline_mode<synchronous>, transform_indices = @transform_1, window_bounds = array<i64: 1, 128>}, {pipeline_mode = #tpu.pipeline_mode<synchronous>, transform_indices = @transform_2, window_bounds = array<i64: 1, 128>}, {pipeline_mode = #tpu.pipeline_mode<synchronous>, transform_indices = @transform_3, window_bounds = array<i64: 128, 256>}, {pipeline_mode = #tpu.pipeline_mode<synchronous>, transform_indices = @transform_4, window_bounds = array<i64: 1, 256>}, {transform_indices = @transform_5, window_bounds = array<i64: 32, 256>}]} {
    %c0 = arith.constant 0 : index
    %c0_0 = arith.constant 0 : index
    %0 = vector.load %arg1[%c0, %c0_0] : memref<32x128xbf16, #tpu.memory_space<vmem>>, vector<32x128xbf16>
    %1 = arith.extf %0 : vector<32x128xbf16> to vector<32x128xf32>
    %cst = arith.constant dense<0.000000e+00> : vector<32xf32>
    %2 = vector.multi_reduction <add>, %1, %cst [1] : vector<32x128xf32> to vector<32xf32>
    %3 = vector.shape_cast %2 : vector<32xf32> to vector<32x1xf32>
    %cst_1 = arith.constant 1.280000e+02 : f32
    %4 = vector.broadcast %cst_1 : f32 to vector<32x1xf32>
    %5 = arith.divf %3, %4 : vector<32x1xf32>
    %6 = vector.broadcast %5 : vector<32x1xf32> to vector<32x128xf32>
    %7 = arith.subf %1, %6 : vector<32x128xf32>
    %8 = arith.mulf %7, %7 : vector<32x128xf32>
    %cst_2 = arith.constant dense<0.000000e+00> : vector<32xf32>
    %9 = vector.multi_reduction <add>, %8, %cst_2 [1] : vector<32x128xf32> to vector<32xf32>
    %10 = vector.shape_cast %9 : vector<32xf32> to vector<32x1xf32>
    %cst_3 = arith.constant 1.280000e+02 : f32
    %11 = vector.broadcast %cst_3 : f32 to vector<32x1xf32>
    %12 = arith.divf %10, %11 : vector<32x1xf32>
    %cst_4 = arith.constant 9.99999974E-6 : f32
    %13 = vector.broadcast %cst_4 : f32 to vector<32x1xf32>
    %14 = arith.addf %12, %13 : vector<32x1xf32>
    %15 = math.rsqrt %14 : vector<32x1xf32>
    %16 = vector.broadcast %15 : vector<32x1xf32> to vector<32x128xf32>
    %17 = arith.mulf %7, %16 : vector<32x128xf32>
    %c0_5 = arith.constant 0 : index
    %c0_6 = arith.constant 0 : index
    %18 = vector.load %arg2[%c0_5, %c0_6] : memref<1x128xf32, #tpu.memory_space<vmem>>, vector<1x128xf32>
    %19 = vector.broadcast %18 : vector<1x128xf32> to vector<32x128xf32>
    %20 = arith.mulf %17, %19 : vector<32x128xf32>
    %c0_7 = arith.constant 0 : index
    %c0_8 = arith.constant 0 : index
    %21 = vector.load %arg3[%c0_7, %c0_8] : memref<1x128xf32, #tpu.memory_space<vmem>>, vector<1x128xf32>
    %22 = vector.broadcast %21 : vector<1x128xf32> to vector<32x128xf32>
    %23 = arith.addf %20, %22 : vector<32x128xf32>
    %24 = arith.truncf %23 : vector<32x128xf32> to vector<32x128xbf16>
    %c0_9 = arith.constant 0 : index
    %c0_10 = arith.constant 0 : index
    %25 = vector.load %arg4[%c0_9, %c0_10] : memref<128x256xbf16, #tpu.memory_space<vmem>>, vector<128x256xbf16>
    %cst_11 = arith.constant dense<0.000000e+00> : vector<32x256xf32>
    %26 = tpu.matmul %24, %25, %cst_11 {dimension_numbers = #tpu.dot_dimension_numbers<[1], [0], [0], [1], [0, 0, 1, 1], [], []>} : vector<32x128xbf16>, vector<128x256xbf16>, vector<32x256xf32> -> vector<32x256xf32>
    %c0_12 = arith.constant 0 : index
    %c0_13 = arith.constant 0 : index
    %27 = vector.load %arg5[%c0_12, %c0_13] : memref<1x256xf32, #tpu.memory_space<vmem>>, vector<1x256xf32>
    %28 = vector.broadcast %27 : vector<1x256xf32> to vector<32x256xf32>
    %29 = arith.addf %26, %28 : vector<32x256xf32>
    %30 = arith.mulf %29, %29 : vector<32x256xf32>
    %31 = arith.mulf %29, %30 : vector<32x256xf32>
    %cst_14 = arith.constant 4.471500e-02 : f32
    %32 = vector.broadcast %cst_14 : f32 to vector<32x256xf32>
    %33 = arith.mulf %32, %31 : vector<32x256xf32>
    %34 = arith.addf %29, %33 : vector<32x256xf32>
    %cst_15 = arith.constant 0.797884583 : f32
    %35 = vector.broadcast %cst_15 : f32 to vector<32x256xf32>
    %36 = arith.mulf %35, %34 : vector<32x256xf32>
    %37 = math.tanh %36 : vector<32x256xf32>
    %cst_16 = arith.constant 1.000000e+00 : f32
    %38 = vector.broadcast %cst_16 : f32 to vector<32x256xf32>
    %39 = arith.addf %38, %37 : vector<32x256xf32>
    %cst_17 = arith.constant 5.000000e-01 : f32
    %40 = vector.broadcast %cst_17 : f32 to vector<32x256xf32>
    %41 = arith.mulf %40, %39 : vector<32x256xf32>
    %42 = arith.mulf %29, %41 : vector<32x256xf32>
    %43 = arith.truncf %42 : vector<32x256xf32> to vector<32x256xbf16>
    %c0_18 = arith.constant 0 : index
    %c0_19 = arith.constant 0 : index
    %44 = vector.load %arg6[%c0_18, %c0_19] : memref<32x256xbf16, #tpu.memory_space<vmem>>, vector<32x256xbf16>
    tpu.vector_store %arg6[%c0_18, %c0_19], %43 {strides = array<i32>} : memref<32x256xbf16, #tpu.memory_space<vmem>>, vector<32x256xbf16>,
    return
  }
  func.func @transform_0(%arg0: i32) -> (i32, i32) {
    %c0_i32 = arith.constant 0 : i32
    %c0_i32_0 = arith.constant 0 : i32
    return %arg0, %c0_i32 : i32, i32
  }
  func.func @transform_1(%arg0: i32) -> (i32, i32) {
    %c0_i32 = arith.constant 0 : i32
    %c0_i32_0 = arith.constant 0 : i32
    %c0_i32_1 = arith.constant 0 : i32
    return %c0_i32, %c0_i32_0 : i32, i32
  }
  func.func @transform_2(%arg0: i32) -> (i32, i32) {
    %c0_i32 = arith.constant 0 : i32
    %c0_i32_0 = arith.constant 0 : i32
    %c0_i32_1 = arith.constant 0 : i32
    return %c0_i32, %c0_i32_0 : i32, i32
  }
  func.func @transform_3(%arg0: i32) -> (i32, i32) {
    %c0_i32 = arith.constant 0 : i32
    %c0_i32_0 = arith.constant 0 : i32
    %c0_i32_1 = arith.constant 0 : i32
    return %c0_i32, %c0_i32_0 : i32, i32
  }
  func.func @transform_4(%arg0: i32) -> (i32, i32) {
    %c0_i32 = arith.constant 0 : i32
    %c0_i32_0 = arith.constant 0 : i32
    %c0_i32_1 = arith.constant 0 : i32
    return %c0_i32, %c0_i32_0 : i32, i32
  }
  func.func @transform_5(%arg0: i32) -> (i32, i32) {
    %c0_i32 = arith.constant 0 : i32
    %c0_i32_0 = arith.constant 0 : i32
    return %arg0, %c0_i32 : i32, i32
  }
}

</mosaic_0001>

<llo_original>
// kernel: prenorm_feedforward.3
$region0: #{prenorm_feedforward.3}
  #allocation0 [shape = 'u32[]', space=smem, size = 0x4, offset = 0x4, fixed_abs, tag = 'smem constant byte address 0x4 - core index']
  #allocation1 [shape = 'u32[144,128]{1,0:T(1,128)}', space=vmem, size = 0x12000, scoped, tag = 'internal scratch']
  %s0 = inlined_call_operand.vmem [shape: bf16[32,256], index: 0, kind: input, shape index: {}]
  %s1 = inlined_call_operand.vmem [shape: bf16[256,128], index: 1, kind: input, shape index: {}]
  %s2 = inlined_call_operand.vmem [shape: f32[1,128], index: 2, kind: input, shape index: {}]
  %s3 = inlined_call_operand.hbm [shape: bf16[32,128], index: 3, kind: output, shape index: {}]
  %s4 = sld [smem:[#allocation0]]
  $region22: #{prenorm_feedforward.3} parent=0
    _
  %s6 = ssub.s32 1, %s4
  %s7 = scalar_select 0, %s6, %s4
  $region1: #{prenorm_feedforward.3} parent=0
    #allocation2 [shape = 'u8[8192]{0}', space=vmem, size = 0x2000, scoped, tag = 'output window, operand 0, single buffered']
    #allocation3 [shape = 's32[1]{0}', space=sflag, size = 0x4, scoped, tag = 'scoped memory for prenorm_feedforward.3']
    %8 = vsyncpa [#allocation3], 0
    // Predicated region
    $region2: #{prenorm_feedforward.3} parent=1 // pred_check
      _
    $region3: #{prenorm_feedforward.3} parent=1 // pred_check_branch
      %10 = sbr.rel (0) target = $region5
    $region4: #{prenorm_feedforward.3} parent=1 // pred_region
      _
    $region5: #{prenorm_feedforward.3} parent=1 // pred_fallthru
      _
    // Predicated region
    $region6: #{prenorm_feedforward.3} parent=1 // pred_check
      _
    $region7: #{prenorm_feedforward.3} parent=1 // pred_check_branch
      %12 = sbr.rel (0) target = $region9
    $region8: #{prenorm_feedforward.3} parent=1 // pred_region
      _
    $region9: #{prenorm_feedforward.3} parent=1 // pred_fallthru
      _
    // Predicated region
    $region10: #{prenorm_feedforward.3} parent=1 // pred_check
      _
    $region11: #{prenorm_feedforward.3} parent=1 // pred_check_branch
      %14 = sbr.rel (0) target = $region13
    $region12: #{prenorm_feedforward.3} parent=1 // pred_region
      _
    $region13: #{prenorm_feedforward.3} parent=1 // pred_fallthru
      _
    %v16 = vld [vmem:[%s0] sm:$0xff]
    %v17 = vld [vmem:[%s0 + $0x8] sm:$0xff]
    %v18 = vld [vmem:[%s0 + $0x10] sm:$0xff]
    %v19 = vld [vmem:[%s0 + $0x18] sm:$0xff]
    %v20 = vld [vmem:[%s1] sm:$0xf]
    %v21 = vld [vmem:[%s1 + $0x4] sm:$0xf]
    %v22 = vld [vmem:[%s1 + $0x8] sm:$0xf]
    %v23 = vld [vmem:[%s1 + $0xc] sm:$0xf]
    %v24 = vld [vmem:[%s1 + $0x10] sm:$0xf]
    %v25 = vld [vmem:[%s1 + $0x14] sm:$0xf]
    %v26 = vld [vmem:[%s1 + $0x18] sm:$0xf]
    %v27 = vld [vmem:[%s1 + $0x1c] sm:$0xf]
    %v28 = vld [vmem:[%s1 + $0x20] sm:$0xf]
    %v29 = vld [vmem:[%s1 + $0x24] sm:$0xf]
    %v30 = vld [vmem:[%s1 + $0x28] sm:$0xf]
    %v31 = vld [vmem:[%s1 + $0x2c] sm:$0xf]
    %v32 = vld [vmem:[%s1 + $0x30] sm:$0xf]
    %v33 = vld [vmem:[%s1 + $0x34] sm:$0xf]
    %v34 = vld [vmem:[%s1 + $0x38] sm:$0xf]
    %v35 = vld [vmem:[%s1 + $0x3c] sm:$0xf]
    %v36 = vld [vmem:[%s1 + $0x40] sm:$0xf]
    %v37 = vld [vmem:[%s1 + $0x44] sm:$0xf]
    %v38 = vld [vmem:[%s1 + $0x48] sm:$0xf]
    %v39 = vld [vmem:[%s1 + $0x4c] sm:$0xf]
    %v40 = vld [vmem:[%s1 + $0x50] sm:$0xf]
    %v41 = vld [vmem:[%s1 + $0x54] sm:$0xf]
    %v42 = vld [vmem:[%s1 + $0x58] sm:$0xf]
    %v43 = vld [vmem:[%s1 + $0x5c] sm:$0xf]
    %v44 = vld [vmem:[%s1 + $0x60] sm:$0xf]
    %v45 = vld [vmem:[%s1 + $0x64] sm:$0xf]
    %v46 = vld [vmem:[%s1 + $0x68] sm:$0xf]
    %v47 = vld [vmem:[%s1 + $0x6c] sm:$0xf]
    %v48 = vld [vmem:[%s1 + $0x70] sm:$0xf]
    %v49 = vld [vmem:[%s1 + $0x74] sm:$0xf]
    %v50 = vld [vmem:[%s1 + $0x78] sm:$0xf]
    %v51 = vld [vmem:[%s1 + $0x7c] sm:$0xf]
    %v52 = vld [vmem:[%s2] sm:$0x1]
    %v54 = vlaneseq
    %v55 = vshrl.u32 %v54, 7
    %v56 = vsub.s32 0, %v55
    %v57 = vrot.slane %v52, %v56
    %v63 = vunpack.c.l.b16 %v16
    %v64 = vunpack.c.h.b16 %v16
    %v65 = vunpack.c.l.b16 %v17
    %v66 = vunpack.c.h.b16 %v17
    %v67 = vunpack.c.l.b16 %v18
    %v68 = vunpack.c.h.b16 %v18
    %v69 = vunpack.c.l.b16 %v19
    %v70 = vunpack.c.h.b16 %v19
    %v71 = vpack.c.b16 %v65, %v63
    %v72 = vpack.c.b16 %v66, %v64
    %v73 = vpack.c.b16 %v69, %v67
    %v74 = vpack.c.b16 %v70, %v68
    %v111 = vunpack.c.l.b16 %v20
    %v112 = vunpack.c.l.b16 %v21
    %v113 = vunpack.c.l.b16 %v22
    %v114 = vunpack.c.l.b16 %v23
    %v115 = vunpack.c.l.b16 %v24
    %v116 = vunpack.c.l.b16 %v25
    %v117 = vunpack.c.l.b16 %v26
    %v118 = vunpack.c.l.b16 %v27
    %v119 = vunpack.c.l.b16 %v28
    %v120 = vunpack.c.l.b16 %v29
    %v121 = vunpack.c.l.b16 %v30
    %v122 = vunpack.c.l.b16 %v31
    %v123 = vunpack.c.l.b16 %v32
    %v124 = vunpack.c.l.b16 %v33
    %v125 = vunpack.c.l.b16 %v34
    %v126 = vunpack.c.l.b16 %v35
    %v127 = vunpack.c.l.b16 %v36
    %v128 = vunpack.c.l.b16 %v37
    %v129 = vunpack.c.l.b16 %v38
    %v130 = vunpack.c.l.b16 %v39
    %v131 = vunpack.c.l.b16 %v40
    %v132 = vunpack.c.l.b16 %v41
    %v133 = vunpack.c.l.b16 %v42
    %v134 = vunpack.c.l.b16 %v43
    %v135 = vunpack.c.l.b16 %v44
    %v136 = vunpack.c.l.b16 %v45
    %v137 = vunpack.c.l.b16 %v46
    %v138 = vunpack.c.l.b16 %v47
    %v139 = vunpack.c.l.b16 %v48
    %v140 = vunpack.c.l.b16 %v49
    %v141 = vunpack.c.l.b16 %v50
    %v142 = vunpack.c.l.b16 %v51
    %v143 = vpack.c.b16 %v112, %v111
    %v144 = vpack.c.b16 %v114, %v113
    %v145 = vpack.c.b16 %v116, %v115
    %v146 = vpack.c.b16 %v118, %v117
    %v147 = vpack.c.b16 %v120, %v119
    %v148 = vpack.c.b16 %v122, %v121
    %v149 = vpack.c.b16 %v124, %v123
    %v150 = vpack.c.b16 %v126, %v125
    %v151 = vpack.c.b16 %v128, %v127
    %v152 = vpack.c.b16 %v130, %v129
    %v153 = vpack.c.b16 %v132, %v131
    %v154 = vpack.c.b16 %v134, %v133
    %v155 = vpack.c.b16 %v136, %v135
    %v156 = vpack.c.b16 %v138, %v137
    %v157 = vpack.c.b16 %v140, %v139
    %v158 = vpack.c.b16 %v142, %v141
    %175 = vmatprep.subr.bf16.mxu0 0
    %176 = vmatpush1.bf16.msra.mxu0 %v143
    %177 = vmatprep.subr.bf16.mxu0 0
    %178 = vmatpush1.bf16.msra.mxu0 %v144
    %179 = vmatprep.subr.bf16.mxu0 0
    %180 = vmatpush1.bf16.msra.mxu0 %v145
    %181 = vmatprep.subr.bf16.mxu0 0
    %182 = vmatpush1.bf16.msra.mxu0 %v146
    %183 = vmatprep.subr.bf16.mxu0 0
    %184 = vmatpush1.bf16.msra.mxu0 %v147
    %185 = vmatprep.subr.bf16.mxu0 0
    %186 = vmatpush1.bf16.msra.mxu0 %v148
    %187 = vmatprep.subr.bf16.mxu0 0
    %188 = vmatpush1.bf16.msra.mxu0 %v149
    %189 = vmatprep.subr.bf16.mxu0 0
    %190 = vmatpush1.bf16.msra.mxu0 %v150
    %191 = vmatprep.subr.bf16.mxu0 0
    %192 = vmatpush1.bf16.msra.mxu0 %v151
    %193 = vmatprep.subr.bf16.mxu0 0
    %194 = vmatpush1.bf16.msra.mxu0 %v152
    %195 = vmatprep.subr.bf16.mxu0 0
    %196 = vmatpush1.bf16.msra.mxu0 %v153
    %197 = vmatprep.subr.bf16.mxu0 0
    %198 = vmatpush1.bf16.msra.mxu0 %v154
    %199 = vmatprep.subr.bf16.mxu0 0
    %200 = vmatpush1.bf16.msra.mxu0 %v155
    %201 = vmatprep.subr.bf16.mxu0 0
    %202 = vmatpush1.bf16.msra.mxu0 %v156
    %203 = vmatprep.subr.bf16.mxu0 0
    %204 = vmatpush1.bf16.msra.mxu0 %v157
    %205 = vmatprep.subr.bf16.mxu0 0
    %206 = vmatpush1.bf16.msra.mxu0 %v158
    %207 = vmatprep.mubr.bf16.mxu0 %v72
    %208 = vmatmul.mubr.bf16.gmra.mrb[0].mxu0 %v71
    %v209 = vpop.f32.mrb[0].mxu0
    %v210 = vadd.f32 %v57, %v209
    %v211 = vpop.f32.mrb[0].mxu0
    %v212 = vpop.f32.mrb[0].mxu0
    %v213 = vadd.f32 %v57, %v212
    %v214 = vpop.f32.mrb[0].mxu0
    %215 = vmatprep.mubr.bf16.mxu0 %v74
    %216 = vmatmul.mubr.bf16.gmra.mrb[0].mxu0 %v73
    %v217 = vpop.f32.mrb[0].mxu0
    %v218 = vadd.f32 %v57, %v217
    %v219 = vpop.f32.mrb[0].mxu0
    %v220 = vpop.f32.mrb[0].mxu0
    %v221 = vadd.f32 %v57, %v220
    %v222 = vpop.f32.mrb[0].mxu0
    %223 = vdwg.mxu0
    %v224 = vpack.c.bf16 %v213, %v210
    %v225 = vpack.c.bf16 %v221, %v218
    %v228 = vunpack.c.l.b16 %v224
    %v229 = vunpack.c.h.b16 %v224
    %v230 = vunpack.c.l.b16 %v225
    %v231 = vunpack.c.h.b16 %v225
    %v232 = vpack.c.b16 %v228, %v228
    %v233 = vpack.c.b16 %v229, %v229
    %v234 = vpack.c.b16 %v230, %v230
    %v235 = vpack.c.b16 %v231, %v231
    %240 = vst [vmem:[#allocation2] sm:$0xf] %v232
    %241 = vst [vmem:[#allocation2 + $0x4] sm:$0xf] %v233
    %242 = vst [vmem:[#allocation2 + $0x8] sm:$0xf] %v234
    %243 = vst [vmem:[#allocation2 + $0xc] sm:$0xf] %v235
    // Predicated region
    $region14: #{prenorm_feedforward.3} parent=1 // pred_check
      _
    $region15: #{prenorm_feedforward.3} parent=1 // pred_check_branch
      %245 = sbr.rel (0) target = $region17
    $region16: #{prenorm_feedforward.3} parent=1 // pred_region
      %s247 = ssub.s32 256, 256
      %248 = vsyncadd [#allocation3], %s247
      %s249 = sshll.u32 [#allocation2], 4
      %s250 = int_to_ptr.vmem [resolvable:$true] %s249
      %255 = dma.vmem_to_hbm [thread:$0]  %s250, 256, %s3, [#allocation3], 64, 64, 4
    $region17: #{prenorm_feedforward.3} parent=1 // pred_fallthru
      _
    // Predicated region
    $region18: #{prenorm_feedforward.3} parent=1 // pred_check
      _
    $region19: #{prenorm_feedforward.3} parent=1 // pred_check_branch
      %257 = sbr.rel (0) target = $region21
    $region20: #{prenorm_feedforward.3} parent=1 // pred_region
      %258 = dma.done [#allocation3], 256
    $region21: #{prenorm_feedforward.3} parent=1 // pred_fallthru
      _
    %259 = vsyncpa [#allocation3], 1

// kernel: prenorm_feedforward.2
$region0: #{prenorm_feedforward.2}
  #allocation0 [shape = 'u32[]', space=smem, size = 0x4, offset = 0x4, fixed_abs, tag = 'smem constant byte address 0x4 - core index']
  #allocation1 [shape = 'u32[144,128]{1,0:T(1,128)}', space=vmem, size = 0x12000, scoped, tag = 'internal scratch']
  %s0 = inlined_call_operand.vmem [shape: bf16[32,128], index: 0, kind: input, shape index: {}]
  %s1 = inlined_call_operand.hbm [shape: f32[1,128], index: 1, kind: input, shape index: {}]
  %s2 = inlined_call_operand.hbm [shape: f32[1,128], index: 2, kind: input, shape index: {}]
  %s3 = inlined_call_operand.hbm [shape: bf16[128,256], index: 3, kind: input, shape index: {}]
  %s4 = inlined_call_operand.hbm [shape: f32[1,256], index: 4, kind: input, shape index: {}]
  %s5 = inlined_call_operand.vmem [shape: bf16[32,256], index: 5, kind: output, shape index: {}]
  %s6 = sld [smem:[#allocation0]]
  $region46: #{prenorm_feedforward.2} parent=0
    _
  %s8 = ssub.s32 1, %s6
  %s9 = scalar_select 0, %s8, %s6
  $region1: #{prenorm_feedforward.2} parent=0
    #allocation2 [shape = 'u8[512]{0}', space=vmem, size = 0x400, scoped, tag = 'input window, operand 1, single buffered']
    #allocation3 [shape = 's32[1]{0}', space=sflag, size = 0x4, scoped, tag = 'scoped memory for prenorm_feedforward.2']
    #allocation4 [shape = 'u8[512]{0}', space=vmem, size = 0x400, scoped, tag = 'input window, operand 2, single buffered']
    #allocation5 [shape = 's32[1]{0}', space=sflag, size = 0x4, scoped, tag = 'scoped memory for prenorm_feedforward.2']
    #allocation6 [shape = 'u8[65536]{0}', space=vmem, size = 0x10000, scoped, tag = 'input window, operand 3, single buffered']
    #allocation7 [shape = 'u8[1024]{0}', space=vmem, size = 0x400, scoped, tag = 'input window, operand 4, single buffered']
    #allocation8 [shape = 's32[1]{0}', space=sflag, size = 0x4, scoped, tag = 'scoped memory for prenorm_feedforward.2']
    %10 = vsyncpa [#allocation3], 0
    %11 = vsyncpa [#allocation5], 0
    %12 = vsyncpa [#allocation8], 0
    // Predicated region
    $region2: #{prenorm_feedforward.2} parent=1 // pred_check
      _
    $region3: #{prenorm_feedforward.2} parent=1 // pred_check_branch
      %14 = sbr.rel (0) target = $region5
    $region4: #{prenorm_feedforward.2} parent=1 // pred_region
      _
    $region5: #{prenorm_feedforward.2} parent=1 // pred_fallthru
      _
    // Predicated region
    $region6: #{prenorm_feedforward.2} parent=1 // pred_check
      _
    $region7: #{prenorm_feedforward.2} parent=1 // pred_check_branch
      %16 = sbr.rel (0) target = $region9
    $region8: #{prenorm_feedforward.2} parent=1 // pred_region
      %s18 = ssub.s32 16, 16
      %19 = vsyncadd [#allocation3], %s18
      %s21 = sshll.u32 [#allocation2], 4
      %s22 = int_to_ptr.vmem [resolvable:$true] %s21
      %24 = dma.hbm_to_vmem [thread:$0]  %s1, 16, %s22, [#allocation3]
    $region9: #{prenorm_feedforward.2} parent=1 // pred_fallthru
      _
    // Predicated region
    $region10: #{prenorm_feedforward.2} parent=1 // pred_check
      _
    $region11: #{prenorm_feedforward.2} parent=1 // pred_check_branch
      %26 = sbr.rel (0) target = $region13
    $region12: #{prenorm_feedforward.2} parent=1 // pred_region
      %s28 = ssub.s32 16, 16
      %29 = vsyncadd [#allocation5], %s28
      %s31 = sshll.u32 [#allocation4], 4
      %s32 = int_to_ptr.vmem [resolvable:$true] %s31
      %34 = dma.hbm_to_vmem [thread:$0]  %s2, 16, %s32, [#allocation5]
    $region13: #{prenorm_feedforward.2} parent=1 // pred_fallthru
      _
    // Predicated region
    $region14: #{prenorm_feedforward.2} parent=1 // pred_check
      _
    $region15: #{prenorm_feedforward.2} parent=1 // pred_check_branch
      %36 = sbr.rel (0) target = $region17
    $region16: #{prenorm_feedforward.2} parent=1 // pred_region
      %s38 = ssub.s32 2048, 2048
      %39 = vsyncadd [#allocation5], %s38
      %s40 = sshll.u32 [#allocation6], 4
      %s41 = int_to_ptr.vmem [resolvable:$true] %s40
      %46 = dma.hbm_to_vmem [thread:$0]  %s3, 2048, %s41, [#allocation5], 128, 128, 8
    $region17: #{prenorm_feedforward.2} parent=1 // pred_fallthru
      _
    // Predicated region
    $region18: #{prenorm_feedforward.2} parent=1 // pred_check
      _
    $region19: #{prenorm_feedforward.2} parent=1 // pred_check_branch
      %48 = sbr.rel (0) target = $region21
    $region20: #{prenorm_feedforward.2} parent=1 // pred_region
      %s50 = ssub.s32 32, 32
      %51 = vsyncadd [#allocation8], %s50
      %s53 = sshll.u32 [#allocation7], 4
      %s54 = int_to_ptr.vmem [resolvable:$true] %s53
      %56 = dma.hbm_to_vmem [thread:$0]  %s4, 32, %s54, [#allocation8]
    $region21: #{prenorm_feedforward.2} parent=1 // pred_fallthru
      _
    // Predicated region
    $region22: #{prenorm_feedforward.2} parent=1 // pred_check
      _
    $region23: #{prenorm_feedforward.2} parent=1 // pred_check_branch
      %58 = sbr.rel (0) target = $region25
    $region24: #{prenorm_feedforward.2} parent=1 // pred_region
      %59 = dma.done [#allocation3], 16
    $region25: #{prenorm_feedforward.2} parent=1 // pred_fallthru
      _
    // Predicated region
    $region26: #{prenorm_feedforward.2} parent=1 // pred_check
      _
    $region27: #{prenorm_feedforward.2} parent=1 // pred_check_branch
      %61 = sbr.rel (0) target = $region29
    $region28: #{prenorm_feedforward.2} parent=1 // pred_region
      %62 = dma.done [#allocation5], 16
    $region29: #{prenorm_feedforward.2} parent=1 // pred_fallthru
      _
    // Predicated region
    $region30: #{prenorm_feedforward.2} parent=1 // pred_check
      _
    $region31: #{prenorm_feedforward.2} parent=1 // pred_check_branch
      %64 = sbr.rel (0) target = $region33
    $region32: #{prenorm_feedforward.2} parent=1 // pred_region
      %65 = dma.done [#allocation5], 2048
    $region33: #{prenorm_feedforward.2} parent=1 // pred_fallthru
      _
    // Predicated region
    $region34: #{prenorm_feedforward.2} parent=1 // pred_check
      _
    $region35: #{prenorm_feedforward.2} parent=1 // pred_check_branch
      %67 = sbr.rel (0) target = $region37
    $region36: #{prenorm_feedforward.2} parent=1 // pred_region
      %68 = dma.done [#allocation8], 32
    $region37: #{prenorm_feedforward.2} parent=1 // pred_fallthru
      _
    %v70 = vld [vmem:[%s0] sm:$0xf]
    %v71 = vld [vmem:[%s0 + $0x4] sm:$0xf]
    %v72 = vld [vmem:[%s0 + $0x8] sm:$0xf]
    %v73 = vld [vmem:[%s0 + $0xc] sm:$0xf]
    %v74 = vunpack.c.l.bf16 %v70
    %v75 = vunpack.c.l.bf16 %v71
    %v76 = vunpack.c.l.bf16 %v72
    %v77 = vunpack.c.l.bf16 %v73
    %78 = vadd.xlane.f32.xlu0 %v74
    %v79 = vpop.xlane.xlu0 %78
    %80 = vadd.xlane.f32.xlu0 %v75
    %v81 = vpop.xlane.xlu0 %80
    %82 = vadd.xlane.f32.xlu0 %v76
    %v83 = vpop.xlane.xlu0 %82
    %84 = vadd.xlane.f32.xlu0 %v77
    %v85 = vpop.xlane.xlu0 %84
    %v86 = vrcp.pop 128.0
    %v87 = vmul.f32 %v79, %v86
    %v88 = vmul.f32 %v81, %v86
    %v89 = vmul.f32 %v83, %v86
    %v90 = vmul.f32 %v85, %v86
    %v91 = vsub.f32 %v74, %v87
    %v92 = vsub.f32 %v75, %v88
    %v93 = vsub.f32 %v76, %v89
    %v94 = vsub.f32 %v77, %v90
    %v95 = vmul.f32 %v91, %v91
    %v96 = vmul.f32 %v92, %v92
    %v97 = vmul.f32 %v93, %v93
    %v98 = vmul.f32 %v94, %v94
    %99 = vadd.xlane.f32.xlu0 %v95
    %v100 = vpop.xlane.xlu0 %99
    %101 = vadd.xlane.f32.xlu0 %v96
    %v102 = vpop.xlane.xlu0 %101
    %103 = vadd.xlane.f32.xlu0 %v97
    %v104 = vpop.xlane.xlu0 %103
    %105 = vadd.xlane.f32.xlu0 %v98
    %v106 = vpop.xlane.xlu0 %105
    %v107 = vmul.f32 %v100, %v86
    %v108 = vmul.f32 %v102, %v86
    %v109 = vmul.f32 %v104, %v86
    %v110 = vmul.f32 %v106, %v86
    %v111 = vadd.f32 %v107, 1e-05
    %v112 = vadd.f32 %v108, 1e-05
    %v113 = vadd.f32 %v109, 1e-05
    %v114 = vadd.f32 %v110, 1e-05
    %v115 = vrsqrt.pop %v111
    %v116 = vrsqrt.pop %v112
    %v117 = vrsqrt.pop %v113
    %v118 = vrsqrt.pop %v114
    %v119 = vmul.f32 %v91, %v115
    %v120 = vmul.f32 %v92, %v116
    %v121 = vmul.f32 %v93, %v117
    %v122 = vmul.f32 %v94, %v118
    %v123 = vld [vmem:[#allocation2] sm:$0x1]
    %v125 = vlaneseq
    %v126 = vshrl.u32 %v125, 7
    %v127 = vsub.s32 0, %v126
    %v128 = vrot.slane %v123, %v127
    %v130 = vmul.f32 %v119, %v128
    %v131 = vmul.f32 %v120, %v128
    %v132 = vmul.f32 %v121, %v128
    %v133 = vmul.f32 %v122, %v128
    %v134 = vld [vmem:[#allocation4] sm:$0x1]
    %v136 = vlaneseq
    %v137 = vshrl.u32 %v136, 7
    %v138 = vsub.s32 0, %v137
    %v139 = vrot.slane %v134, %v138
    %v141 = vadd.f32 %v130, %v139
    %v142 = vadd.f32 %v131, %v139
    %v143 = vadd.f32 %v132, %v139
    %v144 = vadd.f32 %v133, %v139
    %v145 = vpack.c.bf16 %v142, %v141
    %v146 = vpack.c.bf16 %v144, %v143
    %v147 = vld [vmem:[#allocation6] sm:$0xff]
    %v148 = vld [vmem:[#allocation6 + $0x8] sm:$0xff]
    %v149 = vld [vmem:[#allocation6 + $0x10] sm:$0xff]
    %v150 = vld [vmem:[#allocation6 + $0x18] sm:$0xff]
    %v151 = vld [vmem:[#allocation6 + $0x20] sm:$0xff]
    %v152 = vld [vmem:[#allocation6 + $0x28] sm:$0xff]
    %v153 = vld [vmem:[#allocation6 + $0x30] sm:$0xff]
    %v154 = vld [vmem:[#allocation6 + $0x38] sm:$0xff]
    %v155 = vld [vmem:[#allocation6 + $0x40] sm:$0xff]
    %v156 = vld [vmem:[#allocation6 + $0x48] sm:$0xff]
    %v157 = vld [vmem:[#allocation6 + $0x50] sm:$0xff]
    %v158 = vld [vmem:[#allocation6 + $0x58] sm:$0xff]
    %v159 = vld [vmem:[#allocation6 + $0x60] sm:$0xff]
    %v160 = vld [vmem:[#allocation6 + $0x68] sm:$0xff]
    %v161 = vld [vmem:[#allocation6 + $0x70] sm:$0xff]
    %v162 = vld [vmem:[#allocation6 + $0x78] sm:$0xff]
    %v163 = vld [vmem:[#allocation7] sm:$0x3]
    %v165 = vlaneseq
    %v166 = vshrl.u32 %v165, 7
    %v167 = vsub.s32 0, %v166
    %v168 = vrot.slane %v163, %v167
    %v169 = vlaneseq
    %v170 = vshrl.u32 %v169, 7
    %v171 = vsub.s32 1, %v170
    %v172 = vrot.slane %v163, %v171
    %v191 = vunpack.c.l.b16 %v147
    %v192 = vunpack.c.h.b16 %v147
    %v193 = vunpack.c.l.b16 %v148
    %v194 = vunpack.c.h.b16 %v148
    %v195 = vunpack.c.l.b16 %v149
    %v196 = vunpack.c.h.b16 %v149
    %v197 = vunpack.c.l.b16 %v150
    %v198 = vunpack.c.h.b16 %v150
    %v199 = vunpack.c.l.b16 %v151
    %v200 = vunpack.c.h.b16 %v151
    %v201 = vunpack.c.l.b16 %v152
    %v202 = vunpack.c.h.b16 %v152
    %v203 = vunpack.c.l.b16 %v153
    %v204 = vunpack.c.h.b16 %v153
    %v205 = vunpack.c.l.b16 %v154
    %v206 = vunpack.c.h.b16 %v154
    %v207 = vunpack.c.l.b16 %v155
    %v208 = vunpack.c.h.b16 %v155
    %v209 = vunpack.c.l.b16 %v156
    %v210 = vunpack.c.h.b16 %v156
    %v211 = vunpack.c.l.b16 %v157
    %v212 = vunpack.c.h.b16 %v157
    %v213 = vunpack.c.l.b16 %v158
    %v214 = vunpack.c.h.b16 %v158
    %v215 = vunpack.c.l.b16 %v159
    %v216 = vunpack.c.h.b16 %v159
    %v217 = vunpack.c.l.b16 %v160
    %v218 = vunpack.c.h.b16 %v160
    %v219 = vunpack.c.l.b16 %v161
    %v220 = vunpack.c.h.b16 %v161
    %v221 = vunpack.c.l.b16 %v162
    %v222 = vunpack.c.h.b16 %v162
    %v223 = vpack.c.b16 %v193, %v191
    %v224 = vpack.c.b16 %v194, %v192
    %v225 = vpack.c.b16 %v197, %v195
    %v226 = vpack.c.b16 %v198, %v196
    %v227 = vpack.c.b16 %v201, %v199
    %v228 = vpack.c.b16 %v202, %v200
    %v229 = vpack.c.b16 %v205, %v203
    %v230 = vpack.c.b16 %v206, %v204
    %v231 = vpack.c.b16 %v209, %v207
    %v232 = vpack.c.b16 %v210, %v208
    %v233 = vpack.c.b16 %v213, %v211
    %v234 = vpack.c.b16 %v214, %v212
    %v235 = vpack.c.b16 %v217, %v215
    %v236 = vpack.c.b16 %v218, %v216
    %v237 = vpack.c.b16 %v221, %v219
    %v238 = vpack.c.b16 %v222, %v220
    %255 = vmatprep.subr.bf16.mxu0 %v224
    %256 = vmatpush1.bf16.msra.mxu0 %v223
    %257 = vmatprep.subr.bf16.mxu0 %v226
    %258 = vmatpush1.bf16.msra.mxu0 %v225
    %259 = vmatprep.subr.bf16.mxu0 %v228
    %260 = vmatpush1.bf16.msra.mxu0 %v227
    %261 = vmatprep.subr.bf16.mxu0 %v230
    %262 = vmatpush1.bf16.msra.mxu0 %v229
    %263 = vmatprep.subr.bf16.mxu0 %v232
    %264 = vmatpush1.bf16.msra.mxu0 %v231
    %265 = vmatprep.subr.bf16.mxu0 %v234
    %266 = vmatpush1.bf16.msra.mxu0 %v233
    %267 = vmatprep.subr.bf16.mxu0 %v236
    %268 = vmatpush1.bf16.msra.mxu0 %v235
    %269 = vmatprep.subr.bf16.mxu0 %v238
    %270 = vmatpush1.bf16.msra.mxu0 %v237
    %271 = vmatprep.subr.bf16.mxu0 0
    %272 = vmatpush1.bf16.msra.mxu0 0
    %273 = vmatprep.subr.bf16.mxu0 0
    %274 = vmatpush1.bf16.msra.mxu0 0
    %275 = vmatprep.subr.bf16.mxu0 0
    %276 = vmatpush1.bf16.msra.mxu0 0
    %277 = vmatprep.subr.bf16.mxu0 0
    %278 = vmatpush1.bf16.msra.mxu0 0
    %279 = vmatprep.subr.bf16.mxu0 0
    %280 = vmatpush1.bf16.msra.mxu0 0
    %281 = vmatprep.subr.bf16.mxu0 0
    %282 = vmatpush1.bf16.msra.mxu0 0
    %283 = vmatprep.subr.bf16.mxu0 0
    %284 = vmatpush1.bf16.msra.mxu0 0
    %285 = vmatprep.subr.bf16.mxu0 0
    %286 = vmatpush1.bf16.msra.mxu0 0
    %287 = vmatprep.mubr.bf16.mxu0 0
    %288 = vmatmul.mubr.bf16.gmra.mrb[0].mxu0 %v145
    %v289 = vpop.f32.mrb[0].mxu0
    %v290 = vadd.f32 %v168, %v289
    %v291 = vpop.f32.mrb[0].mxu0
    %v292 = vadd.f32 %v172, %v291
    %v293 = vpop.f32.mrb[0].mxu0
    %v294 = vadd.f32 %v168, %v293
    %v295 = vpop.f32.mrb[0].mxu0
    %v296 = vadd.f32 %v172, %v295
    %297 = vmatprep.mubr.bf16.mxu0 0
    %298 = vmatmul.mubr.bf16.gmra.mrb[0].mxu0 %v146
    %v299 = vpop.f32.mrb[0].mxu0
    %v300 = vadd.f32 %v168, %v299
    %v301 = vpop.f32.mrb[0].mxu0
    %v302 = vadd.f32 %v172, %v301
    %v303 = vpop.f32.mrb[0].mxu0
    %v304 = vadd.f32 %v168, %v303
    %v305 = vpop.f32.mrb[0].mxu0
    %v306 = vadd.f32 %v172, %v305
    %307 = vdwg.mxu0
    %v308 = vmul.f32 %v290, %v290
    %v309 = vmul.f32 %v292, %v292
    %v310 = vmul.f32 %v294, %v294
    %v311 = vmul.f32 %v296, %v296
    %v312 = vmul.f32 %v300, %v300
    %v313 = vmul.f32 %v302, %v302
    %v314 = vmul.f32 %v304, %v304
    %v315 = vmul.f32 %v306, %v306
    %v316 = vmul.f32 %v290, %v308
    %v317 = vmul.f32 %v292, %v309
    %v318 = vmul.f32 %v294, %v310
    %v319 = vmul.f32 %v296, %v311
    %v320 = vmul.f32 %v300, %v312
    %v321 = vmul.f32 %v302, %v313
    %v322 = vmul.f32 %v304, %v314
    %v323 = vmul.f32 %v306, %v315
    %v324 = vmul.f32 %v316, 0.044715
    %v325 = vmul.f32 %v317, 0.044715
    %v326 = vmul.f32 %v318, 0.044715
    %v327 = vmul.f32 %v319, 0.044715
    %v328 = vmul.f32 %v320, 0.044715
    %v329 = vmul.f32 %v321, 0.044715
    %v330 = vmul.f32 %v322, 0.044715
    %v331 = vmul.f32 %v323, 0.044715
    %v332 = vadd.f32 %v290, %v324
    %v333 = vadd.f32 %v292, %v325
    %v334 = vadd.f32 %v294, %v326
    %v335 = vadd.f32 %v296, %v327
    %v336 = vadd.f32 %v300, %v328
    %v337 = vadd.f32 %v302, %v329
    %v338 = vadd.f32 %v304, %v330
    %v339 = vadd.f32 %v306, %v331
    %v340 = vmul.f32 %v332, 0.7978846
    %v341 = vmul.f32 %v333, 0.7978846
    %v342 = vmul.f32 %v334, 0.7978846
    %v343 = vmul.f32 %v335, 0.7978846
    %v344 = vmul.f32 %v336, 0.7978846
    %v345 = vmul.f32 %v337, 0.7978846
    %v346 = vmul.f32 %v338, 0.7978846
    %v347 = vmul.f32 %v339, 0.7978846
    %v348 = vtanh.pop %v340
    %v349 = vtanh.pop %v341
    %v350 = vtanh.pop %v342
    %v351 = vtanh.pop %v343
    %v352 = vtanh.pop %v344
    %v353 = vtanh.pop %v345
    %v354 = vtanh.pop %v346
    %v355 = vtanh.pop %v347
    %v356 = vadd.f32 %v348, 1.0
    %v357 = vadd.f32 %v349, 1.0
    %v358 = vadd.f32 %v350, 1.0
    %v359 = vadd.f32 %v351, 1.0
    %v360 = vadd.f32 %v352, 1.0
    %v361 = vadd.f32 %v353, 1.0
    %v362 = vadd.f32 %v354, 1.0
    %v363 = vadd.f32 %v355, 1.0
    %v364 = vmul.f32 %v356, 0.5
    %v365 = vmul.f32 %v357, 0.5
    %v366 = vmul.f32 %v358, 0.5
    %v367 = vmul.f32 %v359, 0.5
    %v368 = vmul.f32 %v360, 0.5
    %v369 = vmul.f32 %v361, 0.5
    %v370 = vmul.f32 %v362, 0.5
    %v371 = vmul.f32 %v363, 0.5
    %v372 = vmul.f32 %v290, %v364
    %v373 = vmul.f32 %v292, %v365
    %v374 = vmul.f32 %v294, %v366
    %v375 = vmul.f32 %v296, %v367
    %v376 = vmul.f32 %v300, %v368
    %v377 = vmul.f32 %v302, %v369
    %v378 = vmul.f32 %v304, %v370
    %v379 = vmul.f32 %v306, %v371
    %v380 = vpack.c.bf16 %v374, %v372
    %v381 = vpack.c.bf16 %v375, %v373
    %v382 = vpack.c.bf16 %v378, %v376
    %v383 = vpack.c.bf16 %v379, %v377
    %v388 = vunpack.c.l.b16 %v380
    %v389 = vunpack.c.l.b16 %v381
    %v390 = vunpack.c.h.b16 %v380
    %v391 = vunpack.c.h.b16 %v381
    %v392 = vunpack.c.l.b16 %v382
    %v393 = vunpack.c.l.b16 %v383
    %v394 = vunpack.c.h.b16 %v382
    %v395 = vunpack.c.h.b16 %v383
    %v396 = vpack.c.b16 %v389, %v388
    %v397 = vpack.c.b16 %v391, %v390
    %v398 = vpack.c.b16 %v393, %v392
    %v399 = vpack.c.b16 %v395, %v394
    %404 = vst [vmem:[%s5] sm:$0xff] %v396
    %405 = vst [vmem:[%s5 + $0x8] sm:$0xff] %v397
    %406 = vst [vmem:[%s5 + $0x10] sm:$0xff] %v398
    %407 = vst [vmem:[%s5 + $0x18] sm:$0xff] %v399
    // Predicated region
    $region38: #{prenorm_feedforward.2} parent=1 // pred_check
      _
    $region39: #{prenorm_feedforward.2} parent=1 // pred_check_branch
      %409 = sbr.rel (0) target = $region41
    $region40: #{prenorm_feedforward.2} parent=1 // pred_region
      _
    $region41: #{prenorm_feedforward.2} parent=1 // pred_fallthru
      _
    // Predicated region
    $region42: #{prenorm_feedforward.2} parent=1 // pred_check
      _
    $region43: #{prenorm_feedforward.2} parent=1 // pred_check_branch
      %411 = sbr.rel (0) target = $region45
    $region44: #{prenorm_feedforward.2} parent=1 // pred_region
      _
    $region45: #{prenorm_feedforward.2} parent=1 // pred_fallthru
      _
    %412 = vsyncpa [#allocation3], 1
    %413 = vsyncpa [#allocation5], 1
    %414 = vsyncpa [#allocation8], 1

</llo_original>
